<compile_context>
chip_gen: v7x
topology: tpu7x:2x2x1
jax: 0.10.0
libtpu: 0.0.40
codegen_flags: <defaults>
</compile_context>

<pallas_src>
import functools

import jax
import jax.numpy as jnp
from jax import lax
from jax.experimental import pallas as pl
from jax.experimental.pallas import tpu as pltpu


def _round_up(x, m):
    return ((x + m - 1) // m) * m


def _contrastive_loss_kernel(pos_ref, neg_ref, total_ref, reg_ref, cdiv_ref,
                             acc_sq_ref, acc_df_ref, *,
                             eta, inv_n, tile_r, lanes, tail_valid):
    i = pl.program_id(0)
    nsteps = pl.num_programs(0)

    @pl.when(i == 0)
    def _init():
        acc_sq_ref[...] = jnp.zeros_like(acc_sq_ref)
        acc_df_ref[...] = jnp.zeros_like(acc_df_ref)

    def _partial(x):
        # (tile_r, lanes) -> (8, lanes): split along the sublane-tile boundary
        # (multiple of 8, no relayout) and sum over the leading axis -> pure
        # VPU vreg adds, no cross-lane (XLU) work in the hot path.
        return x.reshape(tile_r // 8, 8, lanes).sum(axis=0)

    def _accumulate(pos, neg):
        acc_sq_ref[...] += _partial(pos * pos) + _partial(neg * neg)
        acc_df_ref[...] += _partial(pos) - _partial(neg)

    if tail_valid == tile_r:
        # Every block is full: single clean hot path, no masking anywhere.
        _accumulate(pos_ref[...].astype(jnp.float32),
                    neg_ref[...].astype(jnp.float32))
    else:
        @pl.when(i != nsteps - 1)
        def _main():
            _accumulate(pos_ref[...].astype(jnp.float32),
                        neg_ref[...].astype(jnp.float32))

        @pl.when(i == nsteps - 1)
        def _tail():
            # Rows past the array end are filled with unspecified data by the
            # pipeline; mask with a select (not a multiply) so NaN/Inf garbage
            # cannot leak into either accumulator.
            rid = lax.broadcasted_iota(jnp.int32, (tile_r, lanes), 0)
            keep = rid < tail_valid
            p = jnp.where(keep, pos_ref[...].astype(jnp.float32), 0.0)
            n = jnp.where(keep, neg_ref[...].astype(jnp.float32), 0.0)
            _accumulate(p, n)

    @pl.when(i == nsteps - 1)
    def _finalize():
        # Single cross-lane/sublane (XLU) reduction per accumulator, once,
        # over tiny (8, lanes) buffers.
        reg = eta * inv_n * jnp.sum(acc_sq_ref[...])
        cdiv = inv_n * jnp.sum(acc_df_ref[...])
        reg_ref[0, 0] = reg
        cdiv_ref[0, 0] = cdiv
        total_ref[0, 0] = reg + cdiv


def contrastive_loss_forward(output_dict, target_dict=None, *, eta=0.1):
    """Pallas implementation of ContrastiveLoss.forward.

    `target_dict` is accepted for API parity but unused (same as the reference).
    Returns a dict with 'total_loss', 'reg_loss', 'cdiv_loss' scalars (f32).
    """
    del target_dict
    pos = output_dict['pos_energy']
    neg = output_dict['neg_energy']
    assert pos.shape == neg.shape, "pos/neg energies must share a shape"

    n_elems = int(pos.size)
    lanes = 512  # multiple of 128 -> lane-dense loads

    itemsize = jnp.dtype(pos.dtype).itemsize
    # Sublane granularity depends on dtype packing (f32: 8, bf16: 16, int8: 32).
    sublane_mult = max(8, 32 // max(1, itemsize))

    rows = pl.cdiv(n_elems, lanes)          # rows of the 2-D view (all valid)

    # Target ~2 MiB of HBM bytes per input tile regardless of dtype so the
    # ~0.35 us per-grid-step overhead stays amortized (f32: 1024 rows,
    # bf16: 2048, int8: 4096). With 2 inputs x 2 pipeline buffers that is
    # ~8 MiB of VMEM plus two tiny (8, 512) f32 accumulators.
    target_rows = (1024 * 4) // itemsize
    tile_r = min(target_rows, _round_up(rows, sublane_mult))
    tile_r = _round_up(tile_r, sublane_mult)

    nblocks = pl.cdiv(rows, tile_r)
    tail_valid = rows - (nblocks - 1) * tile_r   # valid rows in the last block

    padded_n = rows * lanes

    def _prep(x):
        flat = jnp.ravel(x)
        if padded_n != n_elems:
            # Minimal pad: only up to the next multiple of `lanes` (< 512
            # elements), never to a tile boundary. Zeros contribute exactly 0
            # to both sums. When n_elems is lane-aligned this branch (and its
            # HBM copy) is skipped entirely.
            flat = jnp.pad(flat, (0, padded_n - n_elems))
        return flat.reshape(rows, lanes)

    pos2 = _prep(pos)
    neg2 = _prep(neg)

    kernel = functools.partial(
        _contrastive_loss_kernel,
        eta=float(eta),
        inv_n=1.0 / float(n_elems),
        tile_r=int(tile_r),
        lanes=lanes,
        tail_valid=int(tail_valid))

    scalar_shape = jax.ShapeDtypeStruct((1, 1), jnp.float32)
    total, reg, cdiv = pl.pallas_call(
        kernel,
        out_shape=(scalar_shape, scalar_shape, scalar_shape),
        grid_spec=pltpu.PrefetchScalarGridSpec(
            num_scalar_prefetch=0,
            grid=(int(nblocks),),
            in_specs=[
                pl.BlockSpec((tile_r, lanes), lambda i: (i, 0)),
                pl.BlockSpec((tile_r, lanes), lambda i: (i, 0)),
            ],
            out_specs=(
                pl.BlockSpec(memory_space=pltpu.SMEM),
                pl.BlockSpec(memory_space=pltpu.SMEM),
                pl.BlockSpec(memory_space=pltpu.SMEM),
            ),
            scratch_shapes=[
                pltpu.VMEM((8, lanes), jnp.float32),
                pltpu.VMEM((8, lanes), jnp.float32),
            ],
        ),
        compiler_params=pltpu.CompilerParams(
            dimension_semantics=("arbitrary",),
            vmem_limit_bytes=32 * 1024 * 1024),
        cost_estimate=pl.CostEstimate(
            flops=6 * n_elems,
            transcendentals=0,
            bytes_accessed=2 * n_elems * itemsize + 12),
    )(pos2, neg2)

    return {
        'total_loss': total[0, 0],
        'reg_loss': reg[0, 0],
        'cdiv_loss': cdiv[0, 0],
    }


if __name__ == "__main__":
    key = jax.random.PRNGKey(0)
    k1, k2, k3, k4 = jax.random.split(key, 4)

    # Case 1: small lane-aligned energies (batch=8 samples x 128 energy terms
    # = 1024 elements -> no pad at all; exercises the ragged-block masking).
    pos_a = jax.random.normal(k1, (8, 128), dtype=jnp.float32)
    neg_a = jax.random.normal(k2, (8, 128), dtype=jnp.float32)
    out_a = contrastive_loss_forward(
        {'pos_energy': pos_a, 'neg_energy': neg_a}, {}, eta=0.1)
    jax.block_until_ready(out_a)

    ref_reg_a = 0.1 * jnp.mean(pos_a ** 2 + neg_a ** 2)
    ref_cdiv_a = jnp.mean(pos_a) - jnp.mean(neg_a)
    assert jnp.allclose(out_a['reg_loss'], ref_reg_a, atol=1e-5)
    assert jnp.allclose(out_a['cdiv_loss'], ref_cdiv_a, atol=1e-5)
    assert jnp.allclose(out_a['total_loss'], ref_reg_a + ref_cdiv_a, atol=1e-5)

    # Case 2: non-lane-aligned size (4 x 250 = 1000 elements -> exercises the
    # minimal pad path + ragged-block masking together).
    pos_b = jax.random.normal(k3, (4, 250), dtype=jnp.float32)
    neg_b = jax.random.normal(k4, (4, 250), dtype=jnp.float32)
    out_b = contrastive_loss_forward(
        {'pos_energy': pos_b, 'neg_energy': neg_b}, {}, eta=0.1)
    jax.block_until_ready(out_b)

    ref_reg_b = 0.1 * jnp.mean(pos_b ** 2 + neg_b ** 2)
    ref_cdiv_b = jnp.mean(pos_b) - jnp.mean(neg_b)
    assert jnp.allclose(out_b['reg_loss'], ref_reg_b, atol=1e-5)
    assert jnp.allclose(out_b['cdiv_loss'], ref_cdiv_b, atol=1e-5)
    assert jnp.allclose(out_b['total_loss'], ref_reg_b + ref_cdiv_b, atol=1e-5)

    print("KERNEL_OK")
</pallas_src>

<mosaic_0001>
module attributes {stable_mosaic.version = 11 : i64} {
  func.func @_contrastive_loss_kernel(%arg0: i32, %arg1: memref<8x512xf32, #tpu.memory_space<vmem>>, %arg2: memref<8x512xf32, #tpu.memory_space<vmem>>, %arg3: memref<1x1xf32, #tpu.memory_space<smem>>, %arg4: memref<1x1xf32, #tpu.memory_space<smem>>, %arg5: memref<1x1xf32, #tpu.memory_space<smem>>, %arg6: memref<8x512xf32, #tpu.memory_space<vmem>>, %arg7: memref<8x512xf32, #tpu.memory_space<vmem>>) attributes {dimension_semantics = [#tpu.dimension_semantics<arbitrary>], iteration_bounds = array<i64: 1>, scalar_prefetch = 0 : i64, scratch_operands = 2 : i64, tpu.core_type = #tpu.core_type<tc>, window_params = [{transform_indices = @transform_0, window_bounds = array<i64: 8, 512>}, {transform_indices = @transform_1, window_bounds = array<i64: 8, 512>}, {transform_indices = @transform_2, window_bounds = array<i64: 1, 1>}, {transform_indices = @transform_3, window_bounds = array<i64: 1, 1>}, {transform_indices = @transform_4, window_bounds = array<i64: 1, 1>}]} {
    %c0_i32 = arith.constant 0 : i32
    %0 = arith.cmpi eq, %arg0, %c0_i32 : i32
    %1 = arith.extui %0 : i1 to i32
    %c0_i32_0 = arith.constant 0 : i32
    %2 = arith.cmpi ne, %1, %c0_i32_0 : i32
    scf.if %2 {
      %cst = arith.constant 0.000000e+00 : f32
      %12 = vector.broadcast %cst : f32 to vector<8x512xf32>
      %c0 = arith.constant 0 : index
      %c0_7 = arith.constant 0 : index
      %13 = vector.load %arg6[%c0, %c0_7] : memref<8x512xf32, #tpu.memory_space<vmem>>, vector<8x512xf32>
      tpu.vector_store %arg6[%c0, %c0_7], %12 {strides = array<i32>} : memref<8x512xf32, #tpu.memory_space<vmem>>, vector<8x512xf32>,
      %cst_8 = arith.constant 0.000000e+00 : f32
      %14 = vector.broadcast %cst_8 : f32 to vector<8x512xf32>
      %c0_9 = arith.constant 0 : index
      %c0_10 = arith.constant 0 : index
      %15 = vector.load %arg7[%c0_9, %c0_10] : memref<8x512xf32, #tpu.memory_space<vmem>>, vector<8x512xf32>
      tpu.vector_store %arg7[%c0_9, %c0_10], %14 {strides = array<i32>} : memref<8x512xf32, #tpu.memory_space<vmem>>, vector<8x512xf32>,
    } else {
    }
    %c0_i32_1 = arith.constant 0 : i32
    %3 = arith.cmpi ne, %arg0, %c0_i32_1 : i32
    %4 = arith.extui %3 : i1 to i32
    %c0_i32_2 = arith.constant 0 : i32
    %5 = arith.cmpi ne, %4, %c0_i32_2 : i32
    scf.if %5 {
      %c0 = arith.constant 0 : index
      %c0_7 = arith.constant 0 : index
      %12 = vector.load %arg1[%c0, %c0_7] : memref<8x512xf32, #tpu.memory_space<vmem>>, vector<8x512xf32>
      %c0_8 = arith.constant 0 : index
      %c0_9 = arith.constant 0 : index
      %13 = vector.load %arg2[%c0_8, %c0_9] : memref<8x512xf32, #tpu.memory_space<vmem>>, vector<8x512xf32>
      %c0_10 = arith.constant 0 : index
      %c0_11 = arith.constant 0 : index
      %14 = vector.load %arg6[%c0_10, %c0_11] : memref<8x512xf32, #tpu.memory_space<vmem>>, vector<8x512xf32>
      %15 = arith.mulf %12, %12 : vector<8x512xf32>
      %16 = vector.shape_cast %15 : vector<8x512xf32> to vector<1x8x512xf32>
      %cst = arith.constant dense<0.000000e+00> : vector<8x512xf32>
      %17 = vector.multi_reduction <add>, %16, %cst [0] : vector<1x8x512xf32> to vector<8x512xf32>
      %18 = arith.mulf %13, %13 : vector<8x512xf32>
      %19 = vector.shape_cast %18 : vector<8x512xf32> to vector<1x8x512xf32>
      %cst_12 = arith.constant dense<0.000000e+00> : vector<8x512xf32>
      %20 = vector.multi_reduction <add>, %19, %cst_12 [0] : vector<1x8x512xf32> to vector<8x512xf32>
      %21 = arith.addf %17, %20 : vector<8x512xf32>
      %22 = arith.addf %14, %21 : vector<8x512xf32>
      %c0_13 = arith.constant 0 : index
      %c0_14 = arith.constant 0 : index
      %23 = vector.load %arg6[%c0_13, %c0_14] : memref<8x512xf32, #tpu.memory_space<vmem>>, vector<8x512xf32>
      tpu.vector_store %arg6[%c0_13, %c0_14], %22 {strides = array<i32>} : memref<8x512xf32, #tpu.memory_space<vmem>>, vector<8x512xf32>,
      %c0_15 = arith.constant 0 : index
      %c0_16 = arith.constant 0 : index
      %24 = vector.load %arg7[%c0_15, %c0_16] : memref<8x512xf32, #tpu.memory_space<vmem>>, vector<8x512xf32>
      %25 = vector.shape_cast %12 : vector<8x512xf32> to vector<1x8x512xf32>
      %cst_17 = arith.constant dense<0.000000e+00> : vector<8x512xf32>
      %26 = vector.multi_reduction <add>, %25, %cst_17 [0] : vector<1x8x512xf32> to vector<8x512xf32>
      %27 = vector.shape_cast %13 : vector<8x512xf32> to vector<1x8x512xf32>
      %cst_18 = arith.constant dense<0.000000e+00> : vector<8x512xf32>
      %28 = vector.multi_reduction <add>, %27, %cst_18 [0] : vector<1x8x512xf32> to vector<8x512xf32>
      %29 = arith.subf %26, %28 : vector<8x512xf32>
      %30 = arith.addf %24, %29 : vector<8x512xf32>
      %c0_19 = arith.constant 0 : index
      %c0_20 = arith.constant 0 : index
      %31 = vector.load %arg7[%c0_19, %c0_20] : memref<8x512xf32, #tpu.memory_space<vmem>>, vector<8x512xf32>
      tpu.vector_store %arg7[%c0_19, %c0_20], %30 {strides = array<i32>} : memref<8x512xf32, #tpu.memory_space<vmem>>, vector<8x512xf32>,
    } else {
    }
    %c0_i32_3 = arith.constant 0 : i32
    %6 = arith.cmpi eq, %arg0, %c0_i32_3 : i32
    %7 = arith.extui %6 : i1 to i32
    %c0_i32_4 = arith.constant 0 : i32
    %8 = arith.cmpi ne, %7, %c0_i32_4 : i32
    scf.if %8 {
      %12 = tpu.iota {dimensions = array<i32: 0>} : vector<8x512xi32>
      %c2_i32 = arith.constant 2 : i32
      %13 = vector.broadcast %c2_i32 : i32 to vector<8x512xi32>
      %14 = arith.cmpi slt, %12, %13 : vector<8x512xi32>
      %c0 = arith.constant 0 : index
      %c0_7 = arith.constant 0 : index
      %15 = vector.load %arg1[%c0, %c0_7] : memref<8x512xf32, #tpu.memory_space<vmem>>, vector<8x512xf32>
      %cst = arith.constant 0.000000e+00 : f32
      %16 = vector.broadcast %cst : f32 to vector<8x512xf32>
      %17 = arith.select %14, %15, %16 : vector<8x512xi1>, vector<8x512xf32>
      %c0_8 = arith.constant 0 : index
      %c0_9 = arith.constant 0 : index
      %18 = vector.load %arg2[%c0_8, %c0_9] : memref<8x512xf32, #tpu.memory_space<vmem>>, vector<8x512xf32>
      %cst_10 = arith.constant 0.000000e+00 : f32
      %19 = vector.broadcast %cst_10 : f32 to vector<8x512xf32>
      %20 = arith.select %14, %18, %19 : vector<8x512xi1>, vector<8x512xf32>
      %c0_11 = arith.constant 0 : index
      %c0_12 = arith.constant 0 : index
      %21 = vector.load %arg6[%c0_11, %c0_12] : memref<8x512xf32, #tpu.memory_space<vmem>>, vector<8x512xf32>
      %22 = arith.mulf %17, %17 : vector<8x512xf32>
      %23 = vector.shape_cast %22 : vector<8x512xf32> to vector<1x8x512xf32>
      %cst_13 = arith.constant dense<0.000000e+00> : vector<8x512xf32>
      %24 = vector.multi_reduction <add>, %23, %cst_13 [0] : vector<1x8x512xf32> to vector<8x512xf32>
      %25 = arith.mulf %20, %20 : vector<8x512xf32>
      %26 = vector.shape_cast %25 : vector<8x512xf32> to vector<1x8x512xf32>
      %cst_14 = arith.constant dense<0.000000e+00> : vector<8x512xf32>
      %27 = vector.multi_reduction <add>, %26, %cst_14 [0] : vector<1x8x512xf32> to vector<8x512xf32>
      %28 = arith.addf %24, %27 : vector<8x512xf32>
      %29 = arith.addf %21, %28 : vector<8x512xf32>
      %c0_15 = arith.constant 0 : index
      %c0_16 = arith.constant 0 : index
      %30 = vector.load %arg6[%c0_15, %c0_16] : memref<8x512xf32, #tpu.memory_space<vmem>>, vector<8x512xf32>
      tpu.vector_store %arg6[%c0_15, %c0_16], %29 {strides = array<i32>} : memref<8x512xf32, #tpu.memory_space<vmem>>, vector<8x512xf32>,
      %c0_17 = arith.constant 0 : index
      %c0_18 = arith.constant 0 : index
      %31 = vector.load %arg7[%c0_17, %c0_18] : memref<8x512xf32, #tpu.memory_space<vmem>>, vector<8x512xf32>
      %32 = vector.shape_cast %17 : vector<8x512xf32> to vector<1x8x512xf32>
      %cst_19 = arith.constant dense<0.000000e+00> : vector<8x512xf32>
      %33 = vector.multi_reduction <add>, %32, %cst_19 [0] : vector<1x8x512xf32> to vector<8x512xf32>
      %34 = vector.shape_cast %20 : vector<8x512xf32> to vector<1x8x512xf32>
      %cst_20 = arith.constant dense<0.000000e+00> : vector<8x512xf32>
      %35 = vector.multi_reduction <add>, %34, %cst_20 [0] : vector<1x8x512xf32> to vector<8x512xf32>
      %36 = arith.subf %33, %35 : vector<8x512xf32>
      %37 = arith.addf %31, %36 : vector<8x512xf32>
      %c0_21 = arith.constant 0 : index
      %c0_22 = arith.constant 0 : index
      %38 = vector.load %arg7[%c0_21, %c0_22] : memref<8x512xf32, #tpu.memory_space<vmem>>, vector<8x512xf32>
      tpu.vector_store %arg7[%c0_21, %c0_22], %37 {strides = array<i32>} : memref<8x512xf32, #tpu.memory_space<vmem>>, vector<8x512xf32>,
    } else {
    }
    %c0_i32_5 = arith.constant 0 : i32
    %9 = arith.cmpi eq, %arg0, %c0_i32_5 : i32
    %10 = arith.extui %9 : i1 to i32
    %c0_i32_6 = arith.constant 0 : i32
    %11 = arith.cmpi ne, %10, %c0_i32_6 : i32
    scf.if %11 {
      %c0 = arith.constant 0 : index
      %c0_7 = arith.constant 0 : index
      %12 = vector.load %arg6[%c0, %c0_7] : memref<8x512xf32, #tpu.memory_space<vmem>>, vector<8x512xf32>
      %13 = vector.shape_cast %12 : vector<8x512xf32> to vector<1x8x512xf32>
      %cst = arith.constant dense<0.000000e+00> : vector<1xf32>
      %14 = vector.multi_reduction <add>, %13, %cst [1, 2] : vector<1x8x512xf32> to vector<1xf32>
      %15 = vector.shape_cast %14 : vector<1xf32> to vector<1x1x1xf32>
      %16 = vector.extract %15[0, 0, 0] : f32 from vector<1x1x1xf32>
      %cst_8 = arith.constant 9.76562514E-5 : f32
      %17 = arith.mulf %cst_8, %16 : f32
      %c0_9 = arith.constant 0 : index
      %c0_10 = arith.constant 0 : index
      %18 = vector.load %arg7[%c0_9, %c0_10] : memref<8x512xf32, #tpu.memory_space<vmem>>, vector<8x512xf32>
      %19 = vector.shape_cast %18 : vector<8x512xf32> to vector<1x8x512xf32>
      %cst_11 = arith.constant dense<0.000000e+00> : vector<1xf32>
      %20 = vector.multi_reduction <add>, %19, %cst_11 [1, 2] : vector<1x8x512xf32> to vector<1xf32>
      %21 = vector.shape_cast %20 : vector<1xf32> to vector<1x1x1xf32>
      %22 = vector.extract %21[0, 0, 0] : f32 from vector<1x1x1xf32>
      %cst_12 = arith.constant 9.765625E-4 : f32
      %23 = arith.mulf %cst_12, %22 : f32
      %c0_13 = arith.constant 0 : index
      %c0_14 = arith.constant 0 : index
      %24 = memref.load %arg4[%c0_13, %c0_14] : memref<1x1xf32, #tpu.memory_space<smem>>
      memref.store %17, %arg4[%c0_13, %c0_14] : memref<1x1xf32, #tpu.memory_space<smem>>
      %c0_15 = arith.constant 0 : index
      %c0_16 = arith.constant 0 : index
      %25 = memref.load %arg5[%c0_15, %c0_16] : memref<1x1xf32, #tpu.memory_space<smem>>
      memref.store %23, %arg5[%c0_15, %c0_16] : memref<1x1xf32, #tpu.memory_space<smem>>
      %26 = arith.addf %17, %23 : f32
      %c0_17 = arith.constant 0 : index
      %c0_18 = arith.constant 0 : index
      %27 = memref.load %arg3[%c0_17, %c0_18] : memref<1x1xf32, #tpu.memory_space<smem>>
      memref.store %26, %arg3[%c0_17, %c0_18] : memref<1x1xf32, #tpu.memory_space<smem>>
    } else {
    }
    return
  }
  func.func @transform_0(%arg0: i32) -> (i32, i32) {
    %c0_i32 = arith.constant 0 : i32
    %c0_i32_0 = arith.constant 0 : i32
    return %arg0, %c0_i32 : i32, i32
  }
  func.func @transform_1(%arg0: i32) -> (i32, i32) {
    %c0_i32 = arith.constant 0 : i32
    %c0_i32_0 = arith.constant 0 : i32
    return %arg0, %c0_i32 : i32, i32
  }
  func.func @transform_2(%arg0: i32) -> (i32, i32) {
    %c0_i32 = arith.constant 0 : i32
    %c0_i32_0 = arith.constant 0 : i32
    %c0_i32_1 = arith.constant 0 : i32
    return %c0_i32, %c0_i32_0 : i32, i32
  }
  func.func @transform_3(%arg0: i32) -> (i32, i32) {
    %c0_i32 = arith.constant 0 : i32
    %c0_i32_0 = arith.constant 0 : i32
    %c0_i32_1 = arith.constant 0 : i32
    return %c0_i32, %c0_i32_0 : i32, i32
  }
  func.func @transform_4(%arg0: i32) -> (i32, i32) {
    %c0_i32 = arith.constant 0 : i32
    %c0_i32_0 = arith.constant 0 : i32
    %c0_i32_1 = arith.constant 0 : i32
    return %c0_i32, %c0_i32_0 : i32, i32
  }
}

</mosaic_0001>

<llo_original>
// kernel: tpu_custom_call.1
$region0: #{tpu_custom_call.1}
  #allocation0 [shape = 'u32[]', space=smem, size = 0x4, offset = 0x4, fixed_abs, tag = 'smem constant byte address 0x4 - core index']
  #allocation1 [shape = 'u32[144,128]{1,0:T(1,128)}', space=vmem, size = 0x12000, scoped, tag = 'internal scratch']
  #allocation2 [shape = 'f32[8,512]{1,0:T(8,128)}', space=vmem, size = 0x4000, scoped, tag = 'scratch operand']
  #allocation3 [shape = 'f32[8,512]{1,0:T(8,128)}', space=vmem, size = 0x4000, scoped, tag = 'scratch operand']
  %s0 = inlined_call_operand.hbm [shape: f32[2,512], index: 0, kind: input, shape index: {}]
  %s1 = inlined_call_operand.hbm [shape: f32[2,512], index: 1, kind: input, shape index: {}]
  %s2 = inlined_call_operand.hbm [shape: f32[1,1], index: 2, kind: output, shape index: {0}]
  %s3 = inlined_call_operand.hbm [shape: f32[1,1], index: 3, kind: output, shape index: {1}]
  %s4 = inlined_call_operand.hbm [shape: f32[1,1], index: 4, kind: output, shape index: {2}]
  %5 = xla_tuple %s2, %s3, %s4
  %s6 = sld [smem:[#allocation0]]
  $region54: #{tpu_custom_call.1} parent=0
    _
  %s8 = ssub.s32 1, %s6
  %s9 = scalar_select 0, %s8, %s6
  $region1: #{tpu_custom_call.1} parent=0
    #allocation4 [shape = 'u8[16384]{0}', space=vmem, size = 0x4000, scoped, tag = 'input window, operand 0, single buffered']
    #allocation5 [shape = 's32[1]{0}', space=sflag, size = 0x4, scoped, tag = 'scoped memory for tpu_custom_call.1']
    #allocation6 [shape = 's32[1]{0}', space=sflag, size = 0x4, scoped, tag = 'scoped memory for tpu_custom_call.1']
    #allocation7 [shape = 'u8[16384]{0}', space=vmem, size = 0x4000, scoped, tag = 'input window, operand 1, single buffered']
    #allocation8 [shape = 's32[1]{0}', space=sflag, size = 0x4, scoped, tag = 'scoped memory for tpu_custom_call.1']
    #allocation9 [shape = 'u8[512]{0}', space=smem, size = 0x200, scoped, tag = 'output window, operand 0, single buffered']
    #allocation10 [shape = 'u8[512]{0}', space=smem, size = 0x200, scoped, tag = 'output window, operand 1, single buffered']
    #allocation11 [shape = 's32[1]{0}', space=sflag, size = 0x4, scoped, tag = 'scoped memory for tpu_custom_call.1']
    #allocation12 [shape = 'u8[512]{0}', space=smem, size = 0x200, scoped, tag = 'output window, operand 2, single buffered']
    %10 = vsyncpa [#allocation5], 0
    %11 = vsyncpa [#allocation8], 0
    %12 = vsyncpa [#allocation6], 0
    %13 = vsyncpa [#allocation11], 0
    // Predicated region
    $region2: #{tpu_custom_call.1} parent=1 // pred_check
      _
    $region3: #{tpu_custom_call.1} parent=1 // pred_check_branch
      %15 = sbr.rel (0) target = $region5
    $region4: #{tpu_custom_call.1} parent=1 // pred_region
      %s17 = ssub.s32 512, 128
      %18 = vsyncadd [#allocation5], %s17
      %s19 = sshll.u32 [#allocation4], 4
      %s20 = int_to_ptr.vmem [resolvable:$true] %s19
      %25 = dma.hbm_to_vmem [thread:$0]  %s0, 128, %s20, [#allocation5], 128, 128, 8
    $region5: #{tpu_custom_call.1} parent=1 // pred_fallthru
      _
    // Predicated region
    $region6: #{tpu_custom_call.1} parent=1 // pred_check
      _
    $region7: #{tpu_custom_call.1} parent=1 // pred_check_branch
      %27 = sbr.rel (0) target = $region9
    $region8: #{tpu_custom_call.1} parent=1 // pred_region
      %s29 = ssub.s32 512, 128
      %30 = vsyncadd [#allocation8], %s29
      %s31 = sshll.u32 [#allocation7], 4
      %s32 = int_to_ptr.vmem [resolvable:$true] %s31
      %37 = dma.hbm_to_vmem [thread:$0]  %s1, 128, %s32, [#allocation8], 128, 128, 8
    $region9: #{tpu_custom_call.1} parent=1 // pred_fallthru
      _
    // Predicated region
    $region10: #{tpu_custom_call.1} parent=1 // pred_check
      _
    $region11: #{tpu_custom_call.1} parent=1 // pred_check_branch
      %39 = sbr.rel (0) target = $region13
    $region12: #{tpu_custom_call.1} parent=1 // pred_region
      %40 = dma.done [#allocation5], 512
    $region13: #{tpu_custom_call.1} parent=1 // pred_fallthru
      _
    // Predicated region
    $region14: #{tpu_custom_call.1} parent=1 // pred_check
      _
    $region15: #{tpu_custom_call.1} parent=1 // pred_check_branch
      %42 = sbr.rel (0) target = $region17
    $region16: #{tpu_custom_call.1} parent=1 // pred_region
      %43 = dma.done [#allocation8], 512
    $region17: #{tpu_custom_call.1} parent=1 // pred_fallthru
      _
    %p44 = scmp.eq.s32.totalorder 0, 0
    // Predicated region
    $region18: #{tpu_custom_call.1} parent=1 // pred_check
      %p45 = pneg %p44
    $region19: #{tpu_custom_call.1} parent=1 // pred_check_branch
      %47 = sbr.rel (%p45) target = $region21
    $region20: #{tpu_custom_call.1} parent=1 // pred_region
      %48 = vst [vmem:[#allocation2] sm:$0xff] 0.0
      %49 = vst [vmem:[#allocation2 + $0x8] sm:$0xff] 0.0
      %50 = vst [vmem:[#allocation2 + $0x10] sm:$0xff] 0.0
      %51 = vst [vmem:[#allocation2 + $0x18] sm:$0xff] 0.0
      %52 = vst [vmem:[#allocation3] sm:$0xff] 0.0
      %53 = vst [vmem:[#allocation3 + $0x8] sm:$0xff] 0.0
      %54 = vst [vmem:[#allocation3 + $0x10] sm:$0xff] 0.0
      %55 = vst [vmem:[#allocation3 + $0x18] sm:$0xff] 0.0
    $region21: #{tpu_custom_call.1} parent=1 // pred_fallthru
      _
    %p56 = scmp.ne.s32.totalorder 0, 0
    // Predicated region
    $region22: #{tpu_custom_call.1} parent=1 // pred_check
      %p57 = pneg %p56
    $region23: #{tpu_custom_call.1} parent=1 // pred_check_branch
      %59 = sbr.rel (%p57) target = $region25
    $region24: #{tpu_custom_call.1} parent=1 // pred_region
      %v60 = vld [vmem:[#allocation4] sm:$0xff]
      %v61 = vld [vmem:[#allocation4 + $0x8] sm:$0xff]
      %v62 = vld [vmem:[#allocation4 + $0x10] sm:$0xff]
      %v63 = vld [vmem:[#allocation4 + $0x18] sm:$0xff]
      %v64 = vld [vmem:[#allocation7] sm:$0xff]
      %v65 = vld [vmem:[#allocation7 + $0x8] sm:$0xff]
      %v66 = vld [vmem:[#allocation7 + $0x10] sm:$0xff]
      %v67 = vld [vmem:[#allocation7 + $0x18] sm:$0xff]
      %v68 = vld [vmem:[#allocation2] sm:$0xff]
      %v69 = vld [vmem:[#allocation2 + $0x8] sm:$0xff]
      %v70 = vld [vmem:[#allocation2 + $0x10] sm:$0xff]
      %v71 = vld [vmem:[#allocation2 + $0x18] sm:$0xff]
      %v72 = vmul.f32 %v60, %v60
      %v73 = vmul.f32 %v61, %v61
      %v74 = vmul.f32 %v62, %v62
      %v75 = vmul.f32 %v63, %v63
      %v76 = vadd.f32 %v72, 0.0
      %v77 = vadd.f32 %v73, 0.0
      %v78 = vadd.f32 %v74, 0.0
      %v79 = vadd.f32 %v75, 0.0
      %v80 = vmul.f32 %v64, %v64
      %v81 = vmul.f32 %v65, %v65
      %v82 = vmul.f32 %v66, %v66
      %v83 = vmul.f32 %v67, %v67
      %v84 = vadd.f32 %v80, 0.0
      %v85 = vadd.f32 %v81, 0.0
      %v86 = vadd.f32 %v82, 0.0
      %v87 = vadd.f32 %v83, 0.0
      %v88 = vadd.f32 %v76, %v84
      %v89 = vadd.f32 %v77, %v85
      %v90 = vadd.f32 %v78, %v86
      %v91 = vadd.f32 %v79, %v87
      %v96 = vcombine.low %v88, %v89
      %v97 = vcombine.high %v88, %v89
      %v98 = vcombine.low %v90, %v91
      %v99 = vcombine.high %v90, %v91
      %v101 = vunpack.c.l.s4 1983009808
      %v102 = vunpack.c.0.s8 %v101
      %v103 = vlaneseq
      %v104 = vshrl.u32 %v103, 7
      %v105 = vsub.s32 %v102, %v104
      %v106 = vrot.slane %v96, %v105
      %v108 = vunpack.c.l.s4 1983009808
      %v109 = vunpack.c.0.s8 %v108
      %v110 = vlaneseq
      %v111 = vshrl.u32 %v110, 7
      %v112 = vsub.s32 %v109, %v111
      %v113 = vrot.slane %v97, %v112
      %v115 = vunpack.c.l.s4 1983009808
      %v116 = vunpack.c.0.s8 %v115
      %v117 = vlaneseq
      %v118 = vshrl.u32 %v117, 7
      %v119 = vsub.s32 %v116, %v118
      %v120 = vrot.slane %v98, %v119
      %v122 = vunpack.c.l.s4 1983009808
      %v123 = vunpack.c.0.s8 %v122
      %v124 = vlaneseq
      %v125 = vshrl.u32 %v124, 7
      %v126 = vsub.s32 %v123, %v125
      %v127 = vrot.slane %v99, %v126
      %v128 = vcombine.low %v106, %v120
      %v129 = vcombine.high %v106, %v120
      %v130 = vcombine.low %v113, %v127
      %v131 = vcombine.high %v113, %v127
      %v136 = vadd.f32 %v68, %v128
      %v137 = vadd.f32 %v69, %v129
      %v138 = vadd.f32 %v70, %v130
      %v139 = vadd.f32 %v71, %v131
      %140 = vst [vmem:[#allocation2] sm:$0xff] %v136
      %141 = vst [vmem:[#allocation2 + $0x8] sm:$0xff] %v137
      %142 = vst [vmem:[#allocation2 + $0x10] sm:$0xff] %v138
      %143 = vst [vmem:[#allocation2 + $0x18] sm:$0xff] %v139
      %v144 = vld [vmem:[#allocation3] sm:$0xff]
      %v145 = vld [vmem:[#allocation3 + $0x8] sm:$0xff]
      %v146 = vld [vmem:[#allocation3 + $0x10] sm:$0xff]
      %v147 = vld [vmem:[#allocation3 + $0x18] sm:$0xff]
      %v148 = vadd.f32 %v60, 0.0
      %v149 = vadd.f32 %v61, 0.0
      %v150 = vadd.f32 %v62, 0.0
      %v151 = vadd.f32 %v63, 0.0
      %v152 = vadd.f32 %v64, 0.0
      %v153 = vadd.f32 %v65, 0.0
      %v154 = vadd.f32 %v66, 0.0
      %v155 = vadd.f32 %v67, 0.0
      %v156 = vsub.f32 %v148, %v152
      %v157 = vsub.f32 %v149, %v153
      %v158 = vsub.f32 %v150, %v154
      %v159 = vsub.f32 %v151, %v155
      %v164 = vcombine.low %v156, %v157
      %v165 = vcombine.high %v156, %v157
      %v166 = vcombine.low %v158, %v159
      %v167 = vcombine.high %v158, %v159
      %v169 = vunpack.c.l.s4 1983009808
      %v170 = vunpack.c.0.s8 %v169
      %v171 = vlaneseq
      %v172 = vshrl.u32 %v171, 7
      %v173 = vsub.s32 %v170, %v172
      %v174 = vrot.slane %v164, %v173
      %v176 = vunpack.c.l.s4 1983009808
      %v177 = vunpack.c.0.s8 %v176
      %v178 = vlaneseq
      %v179 = vshrl.u32 %v178, 7
      %v180 = vsub.s32 %v177, %v179
      %v181 = vrot.slane %v165, %v180
      %v183 = vunpack.c.l.s4 1983009808
      %v184 = vunpack.c.0.s8 %v183
      %v185 = vlaneseq
      %v186 = vshrl.u32 %v185, 7
      %v187 = vsub.s32 %v184, %v186
      %v188 = vrot.slane %v166, %v187
      %v190 = vunpack.c.l.s4 1983009808
      %v191 = vunpack.c.0.s8 %v190
      %v192 = vlaneseq
      %v193 = vshrl.u32 %v192, 7
      %v194 = vsub.s32 %v191, %v193
      %v195 = vrot.slane %v167, %v194
      %v196 = vcombine.low %v174, %v188
      %v197 = vcombine.high %v174, %v188
      %v198 = vcombine.low %v181, %v195
      %v199 = vcombine.high %v181, %v195
      %v204 = vadd.f32 %v144, %v196
      %v205 = vadd.f32 %v145, %v197
      %v206 = vadd.f32 %v146, %v198
      %v207 = vadd.f32 %v147, %v199
      %208 = vst [vmem:[#allocation3] sm:$0xff] %v204
      %209 = vst [vmem:[#allocation3 + $0x8] sm:$0xff] %v205
      %210 = vst [vmem:[#allocation3 + $0x10] sm:$0xff] %v206
      %211 = vst [vmem:[#allocation3 + $0x18] sm:$0xff] %v207
    $region25: #{tpu_custom_call.1} parent=1 // pred_fallthru
      _
    // Predicated region
    $region26: #{tpu_custom_call.1} parent=1 // pred_check
      %p212 = pneg %p44
    $region27: #{tpu_custom_call.1} parent=1 // pred_check_branch
      %214 = sbr.rel (%p212) target = $region29
    $region28: #{tpu_custom_call.1} parent=1 // pred_region
      %v215 = vlaneseq
      %v216 = vshrl.u32 %v215, 7
      %vm217 = vcmp.lt.s32.totalorder %v216, 2
      %v218 = vld [vmem:[#allocation4] sm:$0xff]
      %v219 = vld [vmem:[#allocation4 + $0x8] sm:$0xff]
      %v220 = vld [vmem:[#allocation4 + $0x10] sm:$0xff]
      %v221 = vld [vmem:[#allocation4 + $0x18] sm:$0xff]
      %v226 = vcombine.low %v218, %v219
      %v227 = vcombine.high %v218, %v219
      %v228 = vcombine.low %v220, %v221
      %v229 = vcombine.high %v220, %v221
      %v231 = vunpack.c.l.s4 1983009808
      %v232 = vunpack.c.0.s8 %v231
      %v233 = vlaneseq
      %v234 = vshrl.u32 %v233, 7
      %v235 = vsub.s32 %v232, %v234
      %v236 = vrot.slane %v226, %v235
      %v238 = vunpack.c.l.s4 1983009808
      %v239 = vunpack.c.0.s8 %v238
      %v240 = vlaneseq
      %v241 = vshrl.u32 %v240, 7
      %v242 = vsub.s32 %v239, %v241
      %v243 = vrot.slane %v227, %v242
      %v245 = vunpack.c.l.s4 1983009808
      %v246 = vunpack.c.0.s8 %v245
      %v247 = vlaneseq
      %v248 = vshrl.u32 %v247, 7
      %v249 = vsub.s32 %v246, %v248
      %v250 = vrot.slane %v228, %v249
      %v252 = vunpack.c.l.s4 1983009808
      %v253 = vunpack.c.0.s8 %v252
      %v254 = vlaneseq
      %v255 = vshrl.u32 %v254, 7
      %v256 = vsub.s32 %v253, %v255
      %v257 = vrot.slane %v229, %v256
      %v258 = vcombine.low %v236, %v250
      %v259 = vcombine.high %v236, %v250
      %v260 = vcombine.low %v243, %v257
      %v261 = vcombine.high %v243, %v257
      %v266 = vsel %vm217, %v258, 0.0
      %v267 = vsel %vm217, %v259, 0.0
      %v268 = vsel %vm217, %v260, 0.0
      %v269 = vsel %vm217, %v261, 0.0
      %v270 = vld [vmem:[#allocation7] sm:$0xff]
      %v271 = vld [vmem:[#allocation7 + $0x8] sm:$0xff]
      %v272 = vld [vmem:[#allocation7 + $0x10] sm:$0xff]
      %v273 = vld [vmem:[#allocation7 + $0x18] sm:$0xff]
      %v278 = vcombine.low %v270, %v271
      %v279 = vcombine.high %v270, %v271
      %v280 = vcombine.low %v272, %v273
      %v281 = vcombine.high %v272, %v273
      %v283 = vunpack.c.l.s4 1983009808
      %v284 = vunpack.c.0.s8 %v283
      %v285 = vlaneseq
      %v286 = vshrl.u32 %v285, 7
      %v287 = vsub.s32 %v284, %v286
      %v288 = vrot.slane %v278, %v287
      %v290 = vunpack.c.l.s4 1983009808
      %v291 = vunpack.c.0.s8 %v290
      %v292 = vlaneseq
      %v293 = vshrl.u32 %v292, 7
      %v294 = vsub.s32 %v291, %v293
      %v295 = vrot.slane %v279, %v294
      %v297 = vunpack.c.l.s4 1983009808
      %v298 = vunpack.c.0.s8 %v297
      %v299 = vlaneseq
      %v300 = vshrl.u32 %v299, 7
      %v301 = vsub.s32 %v298, %v300
      %v302 = vrot.slane %v280, %v301
      %v304 = vunpack.c.l.s4 1983009808
      %v305 = vunpack.c.0.s8 %v304
      %v306 = vlaneseq
      %v307 = vshrl.u32 %v306, 7
      %v308 = vsub.s32 %v305, %v307
      %v309 = vrot.slane %v281, %v308
      %v310 = vcombine.low %v288, %v302
      %v311 = vcombine.high %v288, %v302
      %v312 = vcombine.low %v295, %v309
      %v313 = vcombine.high %v295, %v309
      %v318 = vsel %vm217, %v310, 0.0
      %v319 = vsel %vm217, %v311, 0.0
      %v320 = vsel %vm217, %v312, 0.0
      %v321 = vsel %vm217, %v313, 0.0
      %v322 = vld [vmem:[#allocation2] sm:$0xff]
      %v323 = vld [vmem:[#allocation2 + $0x8] sm:$0xff]
      %v324 = vld [vmem:[#allocation2 + $0x10] sm:$0xff]
      %v325 = vld [vmem:[#allocation2 + $0x18] sm:$0xff]
      %v326 = vmul.f32 %v266, %v266
      %v327 = vmul.f32 %v267, %v267
      %v328 = vmul.f32 %v268, %v268
      %v329 = vmul.f32 %v269, %v269
      %v330 = vadd.f32 %v326, 0.0
      %v331 = vadd.f32 %v327, 0.0
      %v332 = vadd.f32 %v328, 0.0
      %v333 = vadd.f32 %v329, 0.0
      %v334 = vmul.f32 %v318, %v318
      %v335 = vmul.f32 %v319, %v319
      %v336 = vmul.f32 %v320, %v320
      %v337 = vmul.f32 %v321, %v321
      %v338 = vadd.f32 %v334, 0.0
      %v339 = vadd.f32 %v335, 0.0
      %v340 = vadd.f32 %v336, 0.0
      %v341 = vadd.f32 %v337, 0.0
      %v342 = vadd.f32 %v330, %v338
      %v343 = vadd.f32 %v331, %v339
      %v344 = vadd.f32 %v332, %v340
      %v345 = vadd.f32 %v333, %v341
      %v346 = vadd.f32 %v322, %v342
      %v347 = vadd.f32 %v323, %v343
      %v348 = vadd.f32 %v324, %v344
      %v349 = vadd.f32 %v325, %v345
      %350 = vst [vmem:[#allocation2] sm:$0xff] %v346
      %351 = vst [vmem:[#allocation2 + $0x8] sm:$0xff] %v347
      %352 = vst [vmem:[#allocation2 + $0x10] sm:$0xff] %v348
      %353 = vst [vmem:[#allocation2 + $0x18] sm:$0xff] %v349
      %v354 = vld [vmem:[#allocation3] sm:$0xff]
      %v355 = vld [vmem:[#allocation3 + $0x8] sm:$0xff]
      %v356 = vld [vmem:[#allocation3 + $0x10] sm:$0xff]
      %v357 = vld [vmem:[#allocation3 + $0x18] sm:$0xff]
      %v358 = vadd.f32 %v266, 0.0
      %v359 = vadd.f32 %v267, 0.0
      %v360 = vadd.f32 %v268, 0.0
      %v361 = vadd.f32 %v269, 0.0
      %v362 = vadd.f32 %v318, 0.0
      %v363 = vadd.f32 %v319, 0.0
      %v364 = vadd.f32 %v320, 0.0
      %v365 = vadd.f32 %v321, 0.0
      %v366 = vsub.f32 %v358, %v362
      %v367 = vsub.f32 %v359, %v363
      %v368 = vsub.f32 %v360, %v364
      %v369 = vsub.f32 %v361, %v365
      %v370 = vadd.f32 %v354, %v366
      %v371 = vadd.f32 %v355, %v367
      %v372 = vadd.f32 %v356, %v368
      %v373 = vadd.f32 %v357, %v369
      %374 = vst [vmem:[#allocation3] sm:$0xff] %v370
      %375 = vst [vmem:[#allocation3 + $0x8] sm:$0xff] %v371
      %376 = vst [vmem:[#allocation3 + $0x10] sm:$0xff] %v372
      %377 = vst [vmem:[#allocation3 + $0x18] sm:$0xff] %v373
      %v378 = vld [vmem:[#allocation2] sm:$0xff]
      %v379 = vld [vmem:[#allocation2 + $0x8] sm:$0xff]
      %v380 = vld [vmem:[#allocation2 + $0x10] sm:$0xff]
      %v381 = vld [vmem:[#allocation2 + $0x18] sm:$0xff]
      %v382 = vadd.f32 %v378, %v379
      %v383 = vadd.f32 %v382, %v380
      %v384 = vadd.f32 %v383, %v381
      %385 = vadd.xlane.f32.xlu0 %v384
      %v386 = vpop.xlane.xlu0 %385
      %v387 = vrot.slane %v386, 4
      %v388 = vadd.f32 %v386, %v387
      %v389 = vrot.slane %v388, 2
      %v390 = vadd.f32 %v388, %v389
      %v391 = vrot.slane %v390, 1
      %v392 = vadd.f32 %v390, %v391
      %s393 = vtos %v392
      %s394 = smul.f32 %s393, 9.765625e-05
      %v395 = vld [vmem:[#allocation3] sm:$0xff]
      %v396 = vld [vmem:[#allocation3 + $0x8] sm:$0xff]
      %v397 = vld [vmem:[#allocation3 + $0x10] sm:$0xff]
      %v398 = vld [vmem:[#allocation3 + $0x18] sm:$0xff]
      %v399 = vadd.f32 %v395, %v396
      %v400 = vadd.f32 %v399, %v397
      %v401 = vadd.f32 %v400, %v398
      %402 = vadd.xlane.f32.xlu0 %v401
      %v403 = vpop.xlane.xlu0 %402
      %v404 = vrot.slane %v403, 4
      %v405 = vadd.f32 %v403, %v404
      %v406 = vrot.slane %v405, 2
      %v407 = vadd.f32 %v405, %v406
      %v408 = vrot.slane %v407, 1
      %v409 = vadd.f32 %v407, %v408
      %s410 = vtos %v409
      %s411 = smul.f32 %s410, 0.0009765625
      %s412 = scalar_lea.smem [#allocation10], 0
      %413 = sst [smem:[%s412]] %s394
      %s414 = scalar_lea.smem [#allocation12], 0
      %415 = sst [smem:[%s414]] %s411
      %s416 = sadd.f32 %s394, %s411
      %s417 = scalar_lea.smem [#allocation9], 0
      %418 = sst [smem:[%s417]] %s416
    $region29: #{tpu_custom_call.1} parent=1 // pred_fallthru
      _
    // Predicated region
    $region30: #{tpu_custom_call.1} parent=1 // pred_check
      _
    $region31: #{tpu_custom_call.1} parent=1 // pred_check_branch
      %420 = sbr.rel (0) target = $region33
    $region32: #{tpu_custom_call.1} parent=1 // pred_region
      %s422 = ssub.s32 16, 16
      %423 = vsyncadd [#allocation6], %s422
      %426 = dma.smem_to_hbm [#allocation9], 16, %s2, [#allocation6]
    $region33: #{tpu_custom_call.1} parent=1 // pred_fallthru
      _
    // Predicated region
    $region34: #{tpu_custom_call.1} parent=1 // pred_check
      _
    $region35: #{tpu_custom_call.1} parent=1 // pred_check_branch
      %428 = sbr.rel (0) target = $region37
    $region36: #{tpu_custom_call.1} parent=1 // pred_region
      %s430 = ssub.s32 16, 16
      %431 = vsyncadd [#allocation11], %s430
      %434 = dma.smem_to_hbm [#allocation10], 16, %s3, [#allocation11]
    $region37: #{tpu_custom_call.1} parent=1 // pred_fallthru
      _
    // Predicated region
    $region38: #{tpu_custom_call.1} parent=1 // pred_check
      _
    $region39: #{tpu_custom_call.1} parent=1 // pred_check_branch
      %436 = sbr.rel (0) target = $region41
    $region40: #{tpu_custom_call.1} parent=1 // pred_region
      %s438 = ssub.s32 16, 16
      %439 = vsyncadd [#allocation11], %s438
      %442 = dma.smem_to_hbm [#allocation12], 16, %s4, [#allocation11]
    $region41: #{tpu_custom_call.1} parent=1 // pred_fallthru
      _
    // Predicated region
    $region42: #{tpu_custom_call.1} parent=1 // pred_check
      _
    $region43: #{tpu_custom_call.1} parent=1 // pred_check_branch
      %444 = sbr.rel (0) target = $region45
    $region44: #{tpu_custom_call.1} parent=1 // pred_region
      %445 = dma.done [#allocation6], 16
    $region45: #{tpu_custom_call.1} parent=1 // pred_fallthru
      _
    // Predicated region
    $region46: #{tpu_custom_call.1} parent=1 // pred_check
      _
    $region47: #{tpu_custom_call.1} parent=1 // pred_check_branch
      %447 = sbr.rel (0) target = $region49
    $region48: #{tpu_custom_call.1} parent=1 // pred_region
      %448 = dma.done [#allocation11], 16
    $region49: #{tpu_custom_call.1} parent=1 // pred_fallthru
      _
    // Predicated region
    $region50: #{tpu_custom_call.1} parent=1 // pred_check
      _
    $region51: #{tpu_custom_call.1} parent=1 // pred_check_branch
      %450 = sbr.rel (0) target = $region53
    $region52: #{tpu_custom_call.1} parent=1 // pred_region
      %451 = dma.done [#allocation11], 16
    $region53: #{tpu_custom_call.1} parent=1 // pred_fallthru
      _
    %452 = sfence
    %453 = vsyncpa [#allocation5], 1
    %454 = vsyncpa [#allocation8], 1
    %455 = vsyncpa [#allocation6], 1
    %456 = vsyncpa [#allocation11], 1

</llo_original>
